<compile_context>
chip_gen: v7x
topology: tpu7x:2x2x1
jax: 0.10.0
libtpu: 0.0.40
codegen_flags: <defaults>
</compile_context>

<pallas_src>
import math
import functools

import jax
import jax.numpy as jnp
import numpy as np
from jax import lax
from jax.experimental import pallas as pl
from jax.experimental.pallas import tpu as pltpu


_NEG_BIG = -1e30  # finite stand-in for log(0); avoids -inf / NaN softmax rows


# ----------------------------- Pallas kernel --------------------------------
def _self_attn_kernel(q_ref, k_ref, v_ref, bias_ref, o_ref, *, inv_sqrt_d):
    # q/k/v refs: (bh_blk, L, D) ; bias ref: (L, L) already = log(mask)/sqrt(d)
    q = q_ref[...].astype(jnp.float32) * inv_sqrt_d     # fold 1/sqrt(d) into q
    k = k_ref[...].astype(jnp.float32)
    v = v_ref[...].astype(jnp.float32)

    # logits = q @ k^T for every head at once (batched dot_general, no k.T temp)
    logits = lax.dot_general(
        q, k,
        dimension_numbers=(((2,), (2,)), ((0,), (0,))),
        preferred_element_type=jnp.float32)              # (bh_blk, L, L)

    logits = logits + bias_ref[...][None, :, :]          # additive log-mask

    # softmax along last axis (exact divide: approx reciprocal is too lossy)
    m = jnp.max(logits, axis=-1, keepdims=True)
    p = jnp.exp(logits - m)
    denom = jnp.sum(p, axis=-1, keepdims=True)
    attn = p / denom

    # out = attn @ val (batched)
    out = lax.dot_general(
        attn, v,
        dimension_numbers=(((2,), (1,)), ((0,), (0,))),
        preferred_element_type=jnp.float32)              # (bh_blk, L, D)

    o_ref[...] = out.astype(o_ref.dtype)


# ----------------------------- wrapper ---------------------------------------
def pallas_self_attn(query, key, val, attn_mask, head_dim):
    """SelfAttn.forward.

    query, key, val : (B*nheads, L, head_dim)
    attn_mask       : (L, L) multiplicative mask (1 = keep, 0 = drop) or None
    """
    BH, L, D = query.shape
    inv_sqrt_d = 1.0 / math.sqrt(head_dim)

    # Hoist log(mask) out of the kernel, make it finite, pre-scale by 1/sqrt(d).
    if attn_mask is None:
        bias = jnp.zeros((L, L), jnp.float32)
    else:
        mask = attn_mask.astype(jnp.float32)
        safe = jnp.where(mask > 0, mask, 1.0)
        bias = jnp.where(mask > 0, jnp.log(safe), _NEG_BIG) * inv_sqrt_d

    # Split heads into 2 parallel blocks when possible so v7x's 2 TensorCores
    # both get work; on v5e/v6e (1 TC) this is one extra cheap pipeline step.
    if BH % 2 == 0 and BH >= 2:
        bh_blk = BH // 2
    else:
        bh_blk = BH
    grid = (BH // bh_blk,)

    kernel = functools.partial(_self_attn_kernel, inv_sqrt_d=inv_sqrt_d)
    qkv_spec = pl.BlockSpec((bh_blk, L, D), lambda i: (i, 0, 0))

    return pl.pallas_call(
        kernel,
        out_shape=jax.ShapeDtypeStruct((BH, L, D), query.dtype),
        grid=grid,
        in_specs=[qkv_spec, qkv_spec, qkv_spec,
                  pl.BlockSpec((L, L), lambda i: (0, 0))],
        out_specs=pl.BlockSpec((bh_blk, L, D), lambda i: (i, 0, 0)),
        compiler_params=pltpu.CompilerParams(
            dimension_semantics=("parallel",)),
    )(query, key, val, bias)


# ----------------------------- reference (pure JAX) ---------------------------
def reference_self_attn(query, key, val, attn_mask, head_dim):
    """Literal transcription of the PyTorch SelfAttn.forward."""
    logits = jnp.einsum("bld,bmd->blm", query, key)
    if attn_mask is not None:
        logits = logits + jnp.log(attn_mask)[None]
    logits = logits / math.sqrt(head_dim)
    attn = jax.nn.softmax(logits, axis=-1)
    # dropout(p=0) -> identity
    return jnp.einsum("blm,bmd->bld", attn, val)


# ----------------------------- main -------------------------------------------
if __name__ == "__main__":
    # cfg: hid_sz=32, nheads=4, head_dim=8, drop=0, pos_emb='abs'
    B, nheads, head_dim, L = 2, 4, 8, 8
    BH = B * nheads

    rng = jax.random.PRNGKey(0)
    k_q, k_k, k_v = jax.random.split(rng, 3)
    query = jax.random.normal(k_q, (BH, L, head_dim), jnp.float32)
    key_x = jax.random.normal(k_k, (BH, L, head_dim), jnp.float32)
    val_x = jax.random.normal(k_v, (BH, L, head_dim), jnp.float32)

    # causal multiplicative mask (diagonal kept), as passed to SelfAttn
    attn_mask = jnp.tril(jnp.ones((L, L), jnp.float32))

    out = pallas_self_attn(query, key_x, val_x, attn_mask, head_dim)
    out = jax.block_until_ready(out)

    ref = reference_self_attn(query, key_x, val_x, attn_mask, head_dim)
    np.testing.assert_allclose(np.asarray(out), np.asarray(ref),
                               rtol=1e-4, atol=1e-4)
    print("KERNEL_OK")
</pallas_src>

<mosaic_0001>
module attributes {stable_mosaic.version = 11 : i64} {
  func.func @_self_attn_kernel(%arg0: i32, %arg1: memref<4x8x8xf32, #tpu.memory_space<vmem>>, %arg2: memref<4x8x8xf32, #tpu.memory_space<vmem>>, %arg3: memref<4x8x8xf32, #tpu.memory_space<vmem>>, %arg4: memref<8x8xf32, #tpu.memory_space<vmem>>, %arg5: memref<4x8x8xf32, #tpu.memory_space<vmem>>) attributes {dimension_semantics = [#tpu.dimension_semantics<parallel>], iteration_bounds = array<i64: 2>, scalar_prefetch = 0 : i64, scratch_operands = 0 : i64, tpu.core_type = #tpu.core_type<tc>, window_params = [{transform_indices = @transform_0, window_bounds = array<i64: 4, 8, 8>}, {transform_indices = @transform_1, window_bounds = array<i64: 4, 8, 8>}, {transform_indices = @transform_2, window_bounds = array<i64: 4, 8, 8>}, {pipeline_mode = #tpu.pipeline_mode<synchronous>, transform_indices = @transform_3, window_bounds = array<i64: 8, 8>}, {transform_indices = @transform_4, window_bounds = array<i64: 4, 8, 8>}]} {
    %c0 = arith.constant 0 : index
    %c0_0 = arith.constant 0 : index
    %c0_1 = arith.constant 0 : index
    %0 = vector.load %arg1[%c0, %c0_0, %c0_1] : memref<4x8x8xf32, #tpu.memory_space<vmem>>, vector<4x8x8xf32>
    %cst = arith.constant 0.353553385 : f32
    %1 = vector.broadcast %cst : f32 to vector<4x8x8xf32>
    %2 = arith.mulf %0, %1 : vector<4x8x8xf32>
    %c0_2 = arith.constant 0 : index
    %c0_3 = arith.constant 0 : index
    %c0_4 = arith.constant 0 : index
    %3 = vector.load %arg2[%c0_2, %c0_3, %c0_4] : memref<4x8x8xf32, #tpu.memory_space<vmem>>, vector<4x8x8xf32>
    %c0_5 = arith.constant 0 : index
    %c0_6 = arith.constant 0 : index
    %c0_7 = arith.constant 0 : index
    %4 = vector.load %arg3[%c0_5, %c0_6, %c0_7] : memref<4x8x8xf32, #tpu.memory_space<vmem>>, vector<4x8x8xf32>
    %cst_8 = arith.constant dense<0.000000e+00> : vector<4x8x8xf32>
    %5 = tpu.matmul %2, %3, %cst_8 {dimension_numbers = #tpu.dot_dimension_numbers<[2], [2], [1], [1], [0, 0, 0, 1, 1, 1], [0], [0]>} : vector<4x8x8xf32>, vector<4x8x8xf32>, vector<4x8x8xf32> -> vector<4x8x8xf32>
    %c0_9 = arith.constant 0 : index
    %c0_10 = arith.constant 0 : index
    %6 = vector.load %arg4[%c0_9, %c0_10] : memref<8x8xf32, #tpu.memory_space<vmem>>, vector<8x8xf32>
    %7 = vector.shape_cast %6 : vector<8x8xf32> to vector<1x8x8xf32>
    %8 = vector.broadcast %7 : vector<1x8x8xf32> to vector<4x8x8xf32>
    %9 = arith.addf %5, %8 : vector<4x8x8xf32>
    %cst_11 = arith.constant dense<0xFF800000> : vector<4x8xf32>
    %10 = vector.multi_reduction <maximumf>, %9, %cst_11 [2] : vector<4x8x8xf32> to vector<4x8xf32>
    %11 = vector.shape_cast %10 : vector<4x8xf32> to vector<4x8x1xf32>
    %12 = vector.broadcast %11 : vector<4x8x1xf32> to vector<4x8x8xf32>
    %13 = arith.subf %9, %12 : vector<4x8x8xf32>
    %14 = math.exp %13 : vector<4x8x8xf32>
    %cst_12 = arith.constant dense<0.000000e+00> : vector<4x8xf32>
    %15 = vector.multi_reduction <add>, %14, %cst_12 [2] : vector<4x8x8xf32> to vector<4x8xf32>
    %16 = vector.shape_cast %15 : vector<4x8xf32> to vector<4x8x1xf32>
    %17 = vector.broadcast %16 : vector<4x8x1xf32> to vector<4x8x8xf32>
    %18 = arith.divf %14, %17 : vector<4x8x8xf32>
    %cst_13 = arith.constant dense<0.000000e+00> : vector<4x8x8xf32>
    %19 = tpu.matmul %18, %4, %cst_13 {dimension_numbers = #tpu.dot_dimension_numbers<[2], [1], [1], [2], [0, 0, 0, 1, 1, 2], [0], [0]>} : vector<4x8x8xf32>, vector<4x8x8xf32>, vector<4x8x8xf32> -> vector<4x8x8xf32>
    %c0_14 = arith.constant 0 : index
    %c0_15 = arith.constant 0 : index
    %c0_16 = arith.constant 0 : index
    %20 = vector.load %arg5[%c0_14, %c0_15, %c0_16] : memref<4x8x8xf32, #tpu.memory_space<vmem>>, vector<4x8x8xf32>
    tpu.vector_store %arg5[%c0_14, %c0_15, %c0_16], %19 {strides = array<i32>} : memref<4x8x8xf32, #tpu.memory_space<vmem>>, vector<4x8x8xf32>,
    return
  }
  func.func @transform_0(%arg0: i32) -> (i32, i32, i32) {
    %c0_i32 = arith.constant 0 : i32
    %c0_i32_0 = arith.constant 0 : i32
    %c0_i32_1 = arith.constant 0 : i32
    return %arg0, %c0_i32, %c0_i32_0 : i32, i32, i32
  }
  func.func @transform_1(%arg0: i32) -> (i32, i32, i32) {
    %c0_i32 = arith.constant 0 : i32
    %c0_i32_0 = arith.constant 0 : i32
    %c0_i32_1 = arith.constant 0 : i32
    return %arg0, %c0_i32, %c0_i32_0 : i32, i32, i32
  }
  func.func @transform_2(%arg0: i32) -> (i32, i32, i32) {
    %c0_i32 = arith.constant 0 : i32
    %c0_i32_0 = arith.constant 0 : i32
    %c0_i32_1 = arith.constant 0 : i32
    return %arg0, %c0_i32, %c0_i32_0 : i32, i32, i32
  }
  func.func @transform_3(%arg0: i32) -> (i32, i32) {
    %c0_i32 = arith.constant 0 : i32
    %c0_i32_0 = arith.constant 0 : i32
    %c0_i32_1 = arith.constant 0 : i32
    return %c0_i32, %c0_i32_0 : i32, i32
  }
  func.func @transform_4(%arg0: i32) -> (i32, i32, i32) {
    %c0_i32 = arith.constant 0 : i32
    %c0_i32_0 = arith.constant 0 : i32
    %c0_i32_1 = arith.constant 0 : i32
    return %arg0, %c0_i32, %c0_i32_0 : i32, i32, i32
  }
}

</mosaic_0001>

<llo_original>
// kernel: tpu_custom_call.1
$region0: #{tpu_custom_call.1}
  #allocation0 [shape = 'u32[]', space=smem, size = 0x4, offset = 0x4, fixed_abs, tag = 'smem constant byte address 0x4 - core index']
  #allocation1 [shape = 'u32[144,128]{1,0:T(1,128)}', space=vmem, size = 0x12000, scoped, tag = 'internal scratch']
  %s0 = inlined_call_operand.hbm [shape: f32[8,8,8], index: 0, kind: input, shape index: {}]
  %s1 = inlined_call_operand.hbm [shape: f32[8,8,8], index: 1, kind: input, shape index: {}]
  %s2 = inlined_call_operand.hbm [shape: f32[8,8,8], index: 2, kind: input, shape index: {}]
  %s3 = inlined_call_operand.vmem [shape: f32[8,8], index: 3, kind: input, shape index: {}]
  %s4 = inlined_call_operand.hbm [shape: f32[8,8,8], index: 4, kind: output, shape index: {}]
  %s5 = sld [smem:[#allocation0]]
  $region61: #{tpu_custom_call.1} parent=0
    _
  %s7 = ssub.s32 1, %s5
  %s8 = scalar_select 0, %s7, %s5
  $region1: #{tpu_custom_call.1} parent=0
    #allocation2 [shape = 'u8[32768]{0}', space=vmem, size = 0x8000, scoped, tag = 'input window, operand 0']
    #allocation3 [shape = 's32[2]{0}', space=sflag, size = 0x8, scoped, tag = 'scoped memory for tpu_custom_call.1']
    #allocation4 [shape = 's32[2]{0}', space=sflag, size = 0x8, scoped, tag = 'scoped memory for tpu_custom_call.1']
    #allocation5 [shape = 'u8[32768]{0}', space=vmem, size = 0x8000, scoped, tag = 'input window, operand 1']
    #allocation6 [shape = 's32[2]{0}', space=sflag, size = 0x8, scoped, tag = 'scoped memory for tpu_custom_call.1']
    #allocation7 [shape = 'u8[32768]{0}', space=vmem, size = 0x8000, scoped, tag = 'input window, operand 2']
    #allocation8 [shape = 'u8[32768]{0}', space=vmem, size = 0x8000, scoped, tag = 'output window, operand 0']
    %9 = vsyncpa [#allocation3], 0
    %s10 = scalar_lea.sflag [#allocation3], 1
    %11 = vsyncpa %s10, 0
    %12 = vsyncpa [#allocation6], 0
    %s13 = scalar_lea.sflag [#allocation6], 1
    %14 = vsyncpa %s13, 0
    %15 = vsyncpa [#allocation4], 0
    %s16 = scalar_lea.sflag [#allocation4], 1
    %17 = vsyncpa %s16, 0
    loop: start=0, step=1, limit=4
    $region2: #{tpu_custom_call.1} parent=1 // loop_pre_header
      _
    $region3: #{tpu_custom_call.1} parent=1 // loop_header
      %s19 = sphi 0, %s23
      %p20 = scmp.ge.s32.totalorder %s19, 4
      %s29 = sphi 0, %s31
      %s32 = sphi 0, %s29
      %s33 = sphi 0, %s32
      %s49 = sphi 0, %s33
      %s55 = sphi 0, %s57
      %s58 = sphi 0, %s55
      %s59 = sphi 0, %s58
      %s75 = sphi 0, %s59
      %s81 = sphi 0, %s83
      %s84 = sphi 0, %s81
      %s85 = sphi 0, %s84
      %s101 = sphi 0, %s85
      %s105 = sphi 0, %s105
      %s107 = sphi 0, %s105
      %s108 = sphi 0, %s107
      %s122 = sphi 0, %s108
      %s128 = sphi 0, %s130
      %s131 = sphi 0, %s128
      %s132 = sphi 0, %s131
      %s148 = sphi 0, %s132
    $region4: #{tpu_custom_call.1} parent=1 // loop_header_branch
      %22 = sbr.rel (%p20) target = $region8
    $region5: #{tpu_custom_call.1} parent=1 // loop_body
      %s24 = ssub.s32 %s19, 1
      %s25 = ssub.s32 %s19, 2
      %s26 = sadd.s32 %s19, 1
      %s27 = ssub.s32 %s19, %s26
      %p28 = scmp.eq.s32.totalorder %s27, 0
      %s30 = sadd.s32 %s29, 1
      %s31 = scalar_select %p28, %s29, %s30
      %p34 = pneg %p28
      %p35 = scmp.eq.s32.totalorder %s19, 1
      %p36 = por %p34, %p35
      %p37 = scmp.ne.s32.totalorder %s29, %s32
      %p38 = scmp.eq.s32.totalorder %s19, 0
      %p39 = por %p37, %p38
      %p40 = scmp.ne.s32.totalorder %s29, %s32
      %p41 = scmp.eq.s32.totalorder %s24, 1
      %p42 = por %p40, %p41
      %p43 = scmp.ne.s32.totalorder %s32, %s33
      %p44 = scmp.eq.s32.totalorder %s24, 0
      %p45 = por %p43, %p44
      %p46 = scmp.ne.s32.totalorder %s32, %s33
      %p47 = scmp.eq.s32.totalorder %s25, 1
      %p48 = por %p46, %p47
      %p50 = scmp.ne.s32.totalorder %s33, %s49
      %p51 = scmp.eq.s32.totalorder %s25, 0
      %p52 = por %p50, %p51
      %s53 = ssub.s32 %s19, %s26
      %p54 = scmp.eq.s32.totalorder %s53, 0
      %s56 = sadd.s32 %s55, 1
      %s57 = scalar_select %p54, %s55, %s56
      %p60 = pneg %p54
      %p61 = scmp.eq.s32.totalorder %s19, 1
      %p62 = por %p60, %p61
      %p63 = scmp.ne.s32.totalorder %s55, %s58
      %p64 = scmp.eq.s32.totalorder %s19, 0
      %p65 = por %p63, %p64
      %p66 = scmp.ne.s32.totalorder %s55, %s58
      %p67 = scmp.eq.s32.totalorder %s24, 1
      %p68 = por %p66, %p67
      %p69 = scmp.ne.s32.totalorder %s58, %s59
      %p70 = scmp.eq.s32.totalorder %s24, 0
      %p71 = por %p69, %p70
      %p72 = scmp.ne.s32.totalorder %s58, %s59
      %p73 = scmp.eq.s32.totalorder %s25, 1
      %p74 = por %p72, %p73
      %p76 = scmp.ne.s32.totalorder %s59, %s75
      %p77 = scmp.eq.s32.totalorder %s25, 0
      %p78 = por %p76, %p77
      %s79 = ssub.s32 %s19, %s26
      %p80 = scmp.eq.s32.totalorder %s79, 0
      %s82 = sadd.s32 %s81, 1
      %s83 = scalar_select %p80, %s81, %s82
      %p86 = pneg %p80
      %p87 = scmp.eq.s32.totalorder %s19, 1
      %p88 = por %p86, %p87
      %p89 = scmp.ne.s32.totalorder %s81, %s84
      %p90 = scmp.eq.s32.totalorder %s19, 0
      %p91 = por %p89, %p90
      %p92 = scmp.ne.s32.totalorder %s81, %s84
      %p93 = scmp.eq.s32.totalorder %s24, 1
      %p94 = por %p92, %p93
      %p95 = scmp.ne.s32.totalorder %s84, %s85
      %p96 = scmp.eq.s32.totalorder %s24, 0
      %p97 = por %p95, %p96
      %p98 = scmp.ne.s32.totalorder %s84, %s85
      %p99 = scmp.eq.s32.totalorder %s25, 1
      %p100 = por %p98, %p99
      %p102 = scmp.ne.s32.totalorder %s85, %s101
      %p103 = scmp.eq.s32.totalorder %s25, 0
      %p104 = por %p102, %p103
      %s106 = sadd.s32 %s105, 1
      %p109 = scmp.eq.s32.totalorder %s19, 1
      %p110 = scmp.ne.s32.totalorder %s105, %s107
      %p111 = scmp.eq.s32.totalorder %s19, 0
      %p112 = por %p110, %p111
      %p113 = scmp.ne.s32.totalorder %s105, %s107
      %p114 = scmp.eq.s32.totalorder %s24, 1
      %p115 = por %p113, %p114
      %p116 = scmp.ne.s32.totalorder %s107, %s108
      %p117 = scmp.eq.s32.totalorder %s24, 0
      %p118 = por %p116, %p117
      %p119 = scmp.ne.s32.totalorder %s107, %s108
      %p120 = scmp.eq.s32.totalorder %s25, 1
      %p121 = por %p119, %p120
      %p123 = scmp.ne.s32.totalorder %s108, %s122
      %p124 = scmp.eq.s32.totalorder %s25, 0
      %p125 = por %p123, %p124
      %s126 = ssub.s32 %s19, %s26
      %p127 = scmp.eq.s32.totalorder %s126, 0
      %s129 = sadd.s32 %s128, 1
      %s130 = scalar_select %p127, %s128, %s129
      %p133 = pneg %p127
      %p134 = scmp.eq.s32.totalorder %s19, 1
      %p135 = por %p133, %p134
      %p136 = scmp.ne.s32.totalorder %s128, %s131
      %p137 = scmp.eq.s32.totalorder %s19, 0
      %p138 = por %p136, %p137
      %p139 = scmp.ne.s32.totalorder %s128, %s131
      %p140 = scmp.eq.s32.totalorder %s24, 1
      %p141 = por %p139, %p140
      %p142 = scmp.ne.s32.totalorder %s131, %s132
      %p143 = scmp.eq.s32.totalorder %s24, 0
      %p144 = por %p142, %p143
      %p145 = scmp.ne.s32.totalorder %s131, %s132
      %p146 = scmp.eq.s32.totalorder %s25, 1
      %p147 = por %p145, %p146
      %p149 = scmp.ne.s32.totalorder %s132, %s148
      %p150 = scmp.eq.s32.totalorder %s25, 0
      %p151 = por %p149, %p150
      %p152 = scmp.le.s32.totalorder 1, %s19
      %p153 = scmp.lt.s32.totalorder %s19, 3
      %p154 = pnand %p152, %p153
      %p155 = pneg %p154
      // Predicated region
      $region9: #{tpu_custom_call.1} parent=5 // pred_check
        _
      $region10: #{tpu_custom_call.1} parent=5 // pred_check_branch
        %157 = sbr.rel (%p154) target = $region12
      $region11: #{tpu_custom_call.1} parent=5 // pred_region
        %s158 = ssub.s32 %s19, 1
        // Predicated region
        $region13: #{tpu_custom_call.1} parent=11 // pred_check
          %p159 = pneg %p118
        $region14: #{tpu_custom_call.1} parent=11 // pred_check_branch
          %161 = sbr.rel (%p159) target = $region16
        $region15: #{tpu_custom_call.1} parent=11 // pred_region
          _
        $region16: #{tpu_custom_call.1} parent=11 // pred_fallthru
          _
      $region12: #{tpu_custom_call.1} parent=5 // pred_fallthru
        _
      %p162 = scmp.lt.s32.totalorder %s19, 2
      // Predicated region
      $region17: #{tpu_custom_call.1} parent=5 // pred_check
        %p163 = pneg %p162
      $region18: #{tpu_custom_call.1} parent=5 // pred_check_branch
        %165 = sbr.rel (%p163) target = $region20
      $region19: #{tpu_custom_call.1} parent=5 // pred_region
        // Predicated region
        $region21: #{tpu_custom_call.1} parent=19 // pred_check
          %p166 = pneg %p39
        $region22: #{tpu_custom_call.1} parent=19 // pred_check_branch
          %168 = sbr.rel (%p166) target = $region24
        $region23: #{tpu_custom_call.1} parent=19 // pred_region
          %s169 = sand.u32 %s29, 1
          %s170 = scalar_lea.sflag [#allocation3], %s169
          %s171 = sand.u32 %s29, 1
          %s172 = smul.addr %s171, 32
          %s173 = scalar_lea.vmem [#allocation2], %s172
          %s174 = smul.u32 4, %s19
          %s176 = ssub.s32 512, 512
          %177 = vsyncadd %s170, %s176
          %s178 = smul.addr %s174, 128
          %s179 = scalar_lea.hbm %s0, %s178
          %s180 = sshll.u32 %s173, 4
          %s181 = int_to_ptr.vmem [resolvable:$true] %s180
          %186 = dma.hbm_to_vmem [thread:$0]  %s179, 512, %s181, %s170, 128, 128, 8
        $region24: #{tpu_custom_call.1} parent=19 // pred_fallthru
          _
        // Predicated region
        $region25: #{tpu_custom_call.1} parent=19 // pred_check
          %p187 = pneg %p65
        $region26: #{tpu_custom_call.1} parent=19 // pred_check_branch
          %189 = sbr.rel (%p187) target = $region28
        $region27: #{tpu_custom_call.1} parent=19 // pred_region
          %s190 = sand.u32 %s19, 1
          %s191 = scalar_lea.sflag [#allocation6], %s190
          %s192 = sand.u32 %s55, 1
          %s193 = smul.addr %s192, 32
          %s194 = scalar_lea.vmem [#allocation5], %s193
          %s195 = smul.u32 4, %s19
          %s197 = ssub.s32 512, 512
          %198 = vsyncadd %s191, %s197
          %s199 = smul.addr %s195, 128
          %s200 = scalar_lea.hbm %s1, %s199
          %s201 = sshll.u32 %s194, 4
          %s202 = int_to_ptr.vmem [resolvable:$true] %s201
          %207 = dma.hbm_to_vmem [thread:$0]  %s200, 512, %s202, %s191, 128, 128, 8
        $region28: #{tpu_custom_call.1} parent=19 // pred_fallthru
          _
        // Predicated region
        $region29: #{tpu_custom_call.1} parent=19 // pred_check
          %p208 = pneg %p91
        $region30: #{tpu_custom_call.1} parent=19 // pred_check_branch
          %210 = sbr.rel (%p208) target = $region32
        $region31: #{tpu_custom_call.1} parent=19 // pred_region
          %s211 = sand.u32 %s19, 1
          %s212 = scalar_lea.sflag [#allocation6], %s211
          %s213 = sand.u32 %s81, 1
          %s214 = smul.addr %s213, 32
          %s215 = scalar_lea.vmem [#allocation7], %s214
          %s216 = smul.u32 4, %s19
          %s218 = ssub.s32 512, 512
          %219 = vsyncadd %s212, %s218
          %s220 = smul.addr %s216, 128
          %s221 = scalar_lea.hbm %s2, %s220
          %s222 = sshll.u32 %s215, 4
          %s223 = int_to_ptr.vmem [resolvable:$true] %s222
          %228 = dma.hbm_to_vmem [thread:$0]  %s221, 512, %s223, %s212, 128, 128, 8
        $region32: #{tpu_custom_call.1} parent=19 // pred_fallthru
          _
      $region20: #{tpu_custom_call.1} parent=5 // pred_fallthru
        _
      %p229 = scmp.le.s32.totalorder 1, %s19
      %p230 = scmp.lt.s32.totalorder %s19, 3
      %p231 = pnand %p229, %p230
      %p232 = pneg %p231
      // Predicated region
      $region33: #{tpu_custom_call.1} parent=5 // pred_check
        _
      $region34: #{tpu_custom_call.1} parent=5 // pred_check_branch
        %234 = sbr.rel (%p231) target = $region36
      $region35: #{tpu_custom_call.1} parent=5 // pred_region
        %s235 = ssub.s32 %s19, 1
        %s236 = sand.u32 %s32, 1
        %s237 = scalar_lea.sflag [#allocation3], %s236
        %s238 = sand.u32 %s32, 1
        %s239 = smul.addr %s238, 32
        %s240 = scalar_lea.vmem [#allocation2], %s239
        // Predicated region
        $region37: #{tpu_custom_call.1} parent=35 // pred_check
          %p241 = pneg %p45
        $region38: #{tpu_custom_call.1} parent=35 // pred_check_branch
          %243 = sbr.rel (%p241) target = $region40
        $region39: #{tpu_custom_call.1} parent=35 // pred_region
          %244 = dma.done %s237, 512
        $region40: #{tpu_custom_call.1} parent=35 // pred_fallthru
          _
        %s245 = sand.u32 %s24, 1
        %s246 = scalar_lea.sflag [#allocation6], %s245
        %s247 = sand.u32 %s58, 1
        %s248 = smul.addr %s247, 32
        %s249 = scalar_lea.vmem [#allocation5], %s248
        // Predicated region
        $region41: #{tpu_custom_call.1} parent=35 // pred_check
          %p250 = pneg %p71
        $region42: #{tpu_custom_call.1} parent=35 // pred_check_branch
          %252 = sbr.rel (%p250) target = $region44
        $region43: #{tpu_custom_call.1} parent=35 // pred_region
          %253 = dma.done %s246, 512
        $region44: #{tpu_custom_call.1} parent=35 // pred_fallthru
          _
        %s254 = sand.u32 %s24, 1
        %s255 = scalar_lea.sflag [#allocation6], %s254
        %s256 = sand.u32 %s84, 1
        %s257 = smul.addr %s256, 32
        %s258 = scalar_lea.vmem [#allocation7], %s257
        // Predicated region
        $region45: #{tpu_custom_call.1} parent=35 // pred_check
          %p259 = pneg %p97
        $region46: #{tpu_custom_call.1} parent=35 // pred_check_branch
          %261 = sbr.rel (%p259) target = $region48
        $region47: #{tpu_custom_call.1} parent=35 // pred_region
          %262 = dma.done %s255, 512
        $region48: #{tpu_custom_call.1} parent=35 // pred_fallthru
          _
        %s263 = sand.u32 %s32, 1
        %s264 = scalar_lea.sflag [#allocation3], %s263
        %s265 = sand.u32 %s32, 1
        %s266 = smul.addr %s265, 32
        %s267 = scalar_lea.vmem [#allocation2], %s266
        %p268 = pneg %p45
        %p269 = pneg %p42
        %s270 = sand.u32 %s24, 1
        %s271 = scalar_lea.sflag [#allocation6], %s270
        %s272 = sand.u32 %s58, 1
        %s273 = smul.addr %s272, 32
        %s274 = scalar_lea.vmem [#allocation5], %s273
        %p275 = pneg %p71
        %p276 = pneg %p68
        %s277 = sand.u32 %s24, 1
        %s278 = scalar_lea.sflag [#allocation6], %s277
        %s279 = sand.u32 %s84, 1
        %s280 = smul.addr %s279, 32
        %s281 = scalar_lea.vmem [#allocation7], %s280
        %p282 = pneg %p97
        %p283 = pneg %p94
        %p284 = pneg %p118
        %p285 = pneg %p115
        %p286 = pneg %p144
        %p287 = pneg %p141
        %s288 = sand.u32 %s131, 1
        %s289 = scalar_lea.sflag [#allocation4], %s288
        %s290 = sand.u32 %s131, 1
        %s291 = smul.addr %s290, 32
        %s292 = scalar_lea.vmem [#allocation8], %s291
        %s293 = smul.u32 4, %s24
        %s294 = smul.u32 4, %s24
        %s295 = smul.u32 4, %s24
        %s296 = smul.u32 4, %s24
        %v297 = vld [vmem:[%s240] sm:$0xff]
        %v298 = vld [vmem:[%s240 + $0x8] sm:$0xff]
        %v299 = vld [vmem:[%s240 + $0x10] sm:$0xff]
        %v300 = vld [vmem:[%s240 + $0x18] sm:$0xff]
        %v301 = vmul.f32 %v297, 0.35355338
        %v302 = vmul.f32 %v298, 0.35355338
        %v303 = vmul.f32 %v299, 0.35355338
        %v304 = vmul.f32 %v300, 0.35355338
        %v305 = vld [vmem:[%s249] sm:$0xff]
        %v306 = vld [vmem:[%s249 + $0x8] sm:$0xff]
        %v307 = vld [vmem:[%s249 + $0x10] sm:$0xff]
        %v308 = vld [vmem:[%s249 + $0x18] sm:$0xff]
        %v309 = vld [vmem:[%s258] sm:$0xff]
        %v310 = vld [vmem:[%s258 + $0x8] sm:$0xff]
        %v311 = vld [vmem:[%s258 + $0x10] sm:$0xff]
        %v312 = vld [vmem:[%s258 + $0x18] sm:$0xff]
        %v313 = vld [vmem:[%s3] sm:$0xff]
        %vm314 = vcmask 64512
        %v316 = vsel %vm314, %v301, 0
        %v319 = vsel %vm314, %v305, 0
        %321 = vmatprep.subr.mxu0 0.0
        %322 = vmatpush1.xpose.msra.mxu0 %v319
        %323 = vmatprep.subr.mxu0 0.0
        %324 = vmatpush1.xpose.msra.mxu0 0.0
        %325 = vmatprep.subr.mxu0 0.0
        %326 = vmatpush1.xpose.msra.mxu0 0.0
        %327 = vmatprep.subr.mxu0 0.0
        %328 = vmatpush1.xpose.msra.mxu0 0.0
        %329 = vmatprep.subr.mxu0 0.0
        %330 = vmatpush1.xpose.msra.mxu0 0.0
        %331 = vmatprep.subr.mxu0 0.0
        %332 = vmatpush1.xpose.msra.mxu0 0.0
        %333 = vmatprep.subr.mxu0 0.0
        %334 = vmatpush1.xpose.msra.mxu0 0.0
        %335 = vmatprep.subr.mxu0 0.0
        %336 = vmatpush1.xpose.msra.mxu0 0.0
        %337 = vmatprep.subr.mxu0 0.0
        %338 = vmatpush1.xpose.msra.mxu0 0.0
        %339 = vmatprep.subr.mxu0 0.0
        %340 = vmatpush1.xpose.msra.mxu0 0.0
        %341 = vmatprep.subr.mxu0 0.0
        %342 = vmatpush1.xpose.msra.mxu0 0.0
        %343 = vmatprep.subr.mxu0 0.0
        %344 = vmatpush1.xpose.msra.mxu0 0.0
        %345 = vmatprep.subr.mxu0 0.0
        %346 = vmatpush1.xpose.msra.mxu0 0.0
        %347 = vmatprep.subr.mxu0 0.0
        %348 = vmatpush1.xpose.msra.mxu0 0.0
        %349 = vmatprep.subr.mxu0 0.0
        %350 = vmatpush1.xpose.msra.mxu0 0.0
        %351 = vmatprep.subr.mxu0 0.0
        %352 = vmatpush1.xpose.msra.mxu0 0.0
        %353 = vmatprep.subr.mxu0 0.0
        %354 = vmatpush1.xpose.msra.mxu0 0.0
        %355 = vmatprep.subr.mxu0 0.0
        %356 = vmatpush1.xpose.msra.mxu0 0.0
        %357 = vmatprep.subr.mxu0 0.0
        %358 = vmatpush1.xpose.msra.mxu0 0.0
        %359 = vmatprep.subr.mxu0 0.0
        %360 = vmatpush1.xpose.msra.mxu0 0.0
        %361 = vmatprep.subr.mxu0 0.0
        %362 = vmatpush1.xpose.msra.mxu0 0.0
        %363 = vmatprep.subr.mxu0 0.0
        %364 = vmatpush1.xpose.msra.mxu0 0.0
        %365 = vmatprep.subr.mxu0 0.0
        %366 = vmatpush1.xpose.msra.mxu0 0.0
        %367 = vmatprep.subr.mxu0 0.0
        %368 = vmatpush1.xpose.msra.mxu0 0.0
        %369 = vmatprep.subr.mxu0 0.0
        %370 = vmatpush1.xpose.msra.mxu0 0.0
        %371 = vmatprep.subr.mxu0 0.0
        %372 = vmatpush1.xpose.msra.mxu0 0.0
        %373 = vmatprep.subr.mxu0 0.0
        %374 = vmatpush1.xpose.msra.mxu0 0.0
        %375 = vmatprep.subr.mxu0 0.0
        %376 = vmatpush1.xpose.msra.mxu0 0.0
        %377 = vmatprep.subr.mxu0 0.0
        %378 = vmatpush1.xpose.msra.mxu0 0.0
        %379 = vmatprep.subr.mxu0 0.0
        %380 = vmatpush1.xpose.msra.mxu0 0.0
        %381 = vmatprep.subr.mxu0 0.0
        %382 = vmatpush1.xpose.msra.mxu0 0.0
        %383 = vmatprep.subr.mxu0 0.0
        %384 = vmatpush1.xpose.msra.mxu0 0.0
        %385 = vmatprep.mubr.f32.mxu0 0.0
        %386 = vmatmul.mubr.f32.gmra.mrb[0].mxu0 %v316
        %v387 = vpop.f32.mrb[0].mxu0
        %v388 = vadd.f32 %v313, %v387
        %v389 = vpop.f32.mrb[0].mxu0
        %390 = vdwg.mxu0
        %v392 = vsel %vm314, %v302, 0
        %v395 = vsel %vm314, %v306, 0
        %397 = vmatprep.subr.mxu0 0.0
        %398 = vmatpush1.xpose.msra.mxu0 %v395
        %399 = vmatprep.subr.mxu0 0.0
        %400 = vmatpush1.xpose.msra.mxu0 0.0
        %401 = vmatprep.subr.mxu0 0.0
        %402 = vmatpush1.xpose.msra.mxu0 0.0
        %403 = vmatprep.subr.mxu0 0.0
        %404 = vmatpush1.xpose.msra.mxu0 0.0
        %405 = vmatprep.subr.mxu0 0.0
        %406 = vmatpush1.xpose.msra.mxu0 0.0
        %407 = vmatprep.subr.mxu0 0.0
        %408 = vmatpush1.xpose.msra.mxu0 0.0
        %409 = vmatprep.subr.mxu0 0.0
        %410 = vmatpush1.xpose.msra.mxu0 0.0
        %411 = vmatprep.subr.mxu0 0.0
        %412 = vmatpush1.xpose.msra.mxu0 0.0
        %413 = vmatprep.subr.mxu0 0.0
        %414 = vmatpush1.xpose.msra.mxu0 0.0
        %415 = vmatprep.subr.mxu0 0.0
        %416 = vmatpush1.xpose.msra.mxu0 0.0
        %417 = vmatprep.subr.mxu0 0.0
        %418 = vmatpush1.xpose.msra.mxu0 0.0
        %419 = vmatprep.subr.mxu0 0.0
        %420 = vmatpush1.xpose.msra.mxu0 0.0
        %421 = vmatprep.subr.mxu0 0.0
        %422 = vmatpush1.xpose.msra.mxu0 0.0
        %423 = vmatprep.subr.mxu0 0.0
        %424 = vmatpush1.xpose.msra.mxu0 0.0
        %425 = vmatprep.subr.mxu0 0.0
        %426 = vmatpush1.xpose.msra.mxu0 0.0
        %427 = vmatprep.subr.mxu0 0.0
        %428 = vmatpush1.xpose.msra.mxu0 0.0
        %429 = vmatprep.subr.mxu0 0.0
        %430 = vmatpush1.xpose.msra.mxu0 0.0
        %431 = vmatprep.subr.mxu0 0.0
        %432 = vmatpush1.xpose.msra.mxu0 0.0
        %433 = vmatprep.subr.mxu0 0.0
        %434 = vmatpush1.xpose.msra.mxu0 0.0
        %435 = vmatprep.subr.mxu0 0.0
        %436 = vmatpush1.xpose.msra.mxu0 0.0
        %437 = vmatprep.subr.mxu0 0.0
        %438 = vmatpush1.xpose.msra.mxu0 0.0
        %439 = vmatprep.subr.mxu0 0.0
        %440 = vmatpush1.xpose.msra.mxu0 0.0
        %441 = vmatprep.subr.mxu0 0.0
        %442 = vmatpush1.xpose.msra.mxu0 0.0
        %443 = vmatprep.subr.mxu0 0.0
        %444 = vmatpush1.xpose.msra.mxu0 0.0
        %445 = vmatprep.subr.mxu0 0.0
        %446 = vmatpush1.xpose.msra.mxu0 0.0
        %447 = vmatprep.subr.mxu0 0.0
        %448 = vmatpush1.xpose.msra.mxu0 0.0
        %449 = vmatprep.subr.mxu0 0.0
        %450 = vmatpush1.xpose.msra.mxu0 0.0
        %451 = vmatprep.subr.mxu0 0.0
        %452 = vmatpush1.xpose.msra.mxu0 0.0
        %453 = vmatprep.subr.mxu0 0.0
        %454 = vmatpush1.xpose.msra.mxu0 0.0
        %455 = vmatprep.subr.mxu0 0.0
        %456 = vmatpush1.xpose.msra.mxu0 0.0
        %457 = vmatprep.subr.mxu0 0.0
        %458 = vmatpush1.xpose.msra.mxu0 0.0
        %459 = vmatprep.subr.mxu0 0.0
        %460 = vmatpush1.xpose.msra.mxu0 0.0
        %461 = vmatprep.mubr.f32.mxu0 0.0
        %462 = vmatmul.mubr.f32.gmra.mrb[0].mxu0 %v392
        %v463 = vpop.f32.mrb[0].mxu0
        %v464 = vadd.f32 %v313, %v463
        %v465 = vpop.f32.mrb[0].mxu0
        %466 = vdwg.mxu0
        %v468 = vsel %vm314, %v303, 0
        %v471 = vsel %vm314, %v307, 0
        %473 = vmatprep.subr.mxu0 0.0
        %474 = vmatpush1.xpose.msra.mxu0 %v471
        %475 = vmatprep.subr.mxu0 0.0
        %476 = vmatpush1.xpose.msra.mxu0 0.0
        %477 = vmatprep.subr.mxu0 0.0
        %478 = vmatpush1.xpose.msra.mxu0 0.0
        %479 = vmatprep.subr.mxu0 0.0
        %480 = vmatpush1.xpose.msra.mxu0 0.0
        %481 = vmatprep.subr.mxu0 0.0
        %482 = vmatpush1.xpose.msra.mxu0 0.0
        %483 = vmatprep.subr.mxu0 0.0
        %484 = vmatpush1.xpose.msra.mxu0 0.0
        %485 = vmatprep.subr.mxu0 0.0
        %486 = vmatpush1.xpose.msra.mxu0 0.0
        %487 = vmatprep.subr.mxu0 0.0
        %488 = vmatpush1.xpose.msra.mxu0 0.0
        %489 = vmatprep.subr.mxu0 0.0
        %490 = vmatpush1.xpose.msra.mxu0 0.0
        %491 = vmatprep.subr.mxu0 0.0
        %492 = vmatpush1.xpose.msra.mxu0 0.0
        %493 = vmatprep.subr.mxu0 0.0
        %494 = vmatpush1.xpose.msra.mxu0 0.0
        %495 = vmatprep.subr.mxu0 0.0
        %496 = vmatpush1.xpose.msra.mxu0 0.0
        %497 = vmatprep.subr.mxu0 0.0
        %498 = vmatpush1.xpose.msra.mxu0 0.0
        %499 = vmatprep.subr.mxu0 0.0
        %500 = vmatpush1.xpose.msra.mxu0 0.0
        %501 = vmatprep.subr.mxu0 0.0
        %502 = vmatpush1.xpose.msra.mxu0 0.0
        %503 = vmatprep.subr.mxu0 0.0
        %504 = vmatpush1.xpose.msra.mxu0 0.0
        %505 = vmatprep.subr.mxu0 0.0
        %506 = vmatpush1.xpose.msra.mxu0 0.0
        %507 = vmatprep.subr.mxu0 0.0
        %508 = vmatpush1.xpose.msra.mxu0 0.0
        %509 = vmatprep.subr.mxu0 0.0
        %510 = vmatpush1.xpose.msra.mxu0 0.0
        %511 = vmatprep.subr.mxu0 0.0
        %512 = vmatpush1.xpose.msra.mxu0 0.0
        %513 = vmatprep.subr.mxu0 0.0
        %514 = vmatpush1.xpose.msra.mxu0 0.0
        %515 = vmatprep.subr.mxu0 0.0
        %516 = vmatpush1.xpose.msra.mxu0 0.0
        %517 = vmatprep.subr.mxu0 0.0
        %518 = vmatpush1.xpose.msra.mxu0 0.0
        %519 = vmatprep.subr.mxu0 0.0
        %520 = vmatpush1.xpose.msra.mxu0 0.0
        %521 = vmatprep.subr.mxu0 0.0
        %522 = vmatpush1.xpose.msra.mxu0 0.0
        %523 = vmatprep.subr.mxu0 0.0
        %524 = vmatpush1.xpose.msra.mxu0 0.0
        %525 = vmatprep.subr.mxu0 0.0
        %526 = vmatpush1.xpose.msra.mxu0 0.0
        %527 = vmatprep.subr.mxu0 0.0
        %528 = vmatpush1.xpose.msra.mxu0 0.0
        %529 = vmatprep.subr.mxu0 0.0
        %530 = vmatpush1.xpose.msra.mxu0 0.0
        %531 = vmatprep.subr.mxu0 0.0
        %532 = vmatpush1.xpose.msra.mxu0 0.0
        %533 = vmatprep.subr.mxu0 0.0
        %534 = vmatpush1.xpose.msra.mxu0 0.0
        %535 = vmatprep.subr.mxu0 0.0
        %536 = vmatpush1.xpose.msra.mxu0 0.0
        %537 = vmatprep.mubr.f32.mxu0 0.0
        %538 = vmatmul.mubr.f32.gmra.mrb[0].mxu0 %v468
        %v539 = vpop.f32.mrb[0].mxu0
        %v540 = vadd.f32 %v313, %v539
        %v541 = vpop.f32.mrb[0].mxu0
        %542 = vdwg.mxu0
        %v544 = vsel %vm314, %v304, 0
        %v547 = vsel %vm314, %v308, 0
        %549 = vmatprep.subr.mxu0 0.0
        %550 = vmatpush1.xpose.msra.mxu0 %v547
        %551 = vmatprep.subr.mxu0 0.0
        %552 = vmatpush1.xpose.msra.mxu0 0.0
        %553 = vmatprep.subr.mxu0 0.0
        %554 = vmatpush1.xpose.msra.mxu0 0.0
        %555 = vmatprep.subr.mxu0 0.0
        %556 = vmatpush1.xpose.msra.mxu0 0.0
        %557 = vmatprep.subr.mxu0 0.0
        %558 = vmatpush1.xpose.msra.mxu0 0.0
        %559 = vmatprep.subr.mxu0 0.0
        %560 = vmatpush1.xpose.msra.mxu0 0.0
        %561 = vmatprep.subr.mxu0 0.0
        %562 = vmatpush1.xpose.msra.mxu0 0.0
        %563 = vmatprep.subr.mxu0 0.0
        %564 = vmatpush1.xpose.msra.mxu0 0.0
        %565 = vmatprep.subr.mxu0 0.0
        %566 = vmatpush1.xpose.msra.mxu0 0.0
        %567 = vmatprep.subr.mxu0 0.0
        %568 = vmatpush1.xpose.msra.mxu0 0.0
        %569 = vmatprep.subr.mxu0 0.0
        %570 = vmatpush1.xpose.msra.mxu0 0.0
        %571 = vmatprep.subr.mxu0 0.0
        %572 = vmatpush1.xpose.msra.mxu0 0.0
        %573 = vmatprep.subr.mxu0 0.0
        %574 = vmatpush1.xpose.msra.mxu0 0.0
        %575 = vmatprep.subr.mxu0 0.0
        %576 = vmatpush1.xpose.msra.mxu0 0.0
        %577 = vmatprep.subr.mxu0 0.0
        %578 = vmatpush1.xpose.msra.mxu0 0.0
        %579 = vmatprep.subr.mxu0 0.0
        %580 = vmatpush1.xpose.msra.mxu0 0.0
        %581 = vmatprep.subr.mxu0 0.0
        %582 = vmatpush1.xpose.msra.mxu0 0.0
        %583 = vmatprep.subr.mxu0 0.0
        %584 = vmatpush1.xpose.msra.mxu0 0.0
        %585 = vmatprep.subr.mxu0 0.0
        %586 = vmatpush1.xpose.msra.mxu0 0.0
        %587 = vmatprep.subr.mxu0 0.0
        %588 = vmatpush1.xpose.msra.mxu0 0.0
        %589 = vmatprep.subr.mxu0 0.0
        %590 = vmatpush1.xpose.msra.mxu0 0.0
        %591 = vmatprep.subr.mxu0 0.0
        %592 = vmatpush1.xpose.msra.mxu0 0.0
        %593 = vmatprep.subr.mxu0 0.0
        %594 = vmatpush1.xpose.msra.mxu0 0.0
        %595 = vmatprep.subr.mxu0 0.0
        %596 = vmatpush1.xpose.msra.mxu0 0.0
        %597 = vmatprep.subr.mxu0 0.0
        %598 = vmatpush1.xpose.msra.mxu0 0.0
        %599 = vmatprep.subr.mxu0 0.0
        %600 = vmatpush1.xpose.msra.mxu0 0.0
        %601 = vmatprep.subr.mxu0 0.0
        %602 = vmatpush1.xpose.msra.mxu0 0.0
        %603 = vmatprep.subr.mxu0 0.0
        %604 = vmatpush1.xpose.msra.mxu0 0.0
        %605 = vmatprep.subr.mxu0 0.0
        %606 = vmatpush1.xpose.msra.mxu0 0.0
        %607 = vmatprep.subr.mxu0 0.0
        %608 = vmatpush1.xpose.msra.mxu0 0.0
        %609 = vmatprep.subr.mxu0 0.0
        %610 = vmatpush1.xpose.msra.mxu0 0.0
        %611 = vmatprep.subr.mxu0 0.0
        %612 = vmatpush1.xpose.msra.mxu0 0.0
        %613 = vmatprep.mubr.f32.mxu0 0.0
        %614 = vmatmul.mubr.f32.gmra.mrb[0].mxu0 %v544
        %v615 = vpop.f32.mrb[0].mxu0
        %v616 = vadd.f32 %v313, %v615
        %v617 = vpop.f32.mrb[0].mxu0
        %618 = vdwg.mxu0
        %v619 = vsel %vm314, %v388, -inf
        %620 = vmax.xlane.f32.xlu0 %v619
        %v621 = vpop.xlane.xlu0 %620
        %v622 = vsel %vm314, %v464, -inf
        %623 = vmax.xlane.f32.xlu0 %v622
        %v624 = vpop.xlane.xlu0 %623
        %v625 = vsel %vm314, %v540, -inf
        %626 = vmax.xlane.f32.xlu0 %v625
        %v627 = vpop.xlane.xlu0 %626
        %v628 = vsel %vm314, %v616, -inf
        %629 = vmax.xlane.f32.xlu0 %v628
        %v630 = vpop.xlane.xlu0 %629
        %v631 = vsub.f32 %v388, %v621
        %v632 = vsub.f32 %v464, %v624
        %v633 = vsub.f32 %v540, %v627
        %v634 = vsub.f32 %v616, %v630
        %v635 = vmul.f32 %v631, 1.442695
        %v636 = vpow.pop %v635
        %v637 = vmul.f32 %v632, 1.442695
        %v638 = vpow.pop %v637
        %v639 = vmul.f32 %v633, 1.442695
        %v640 = vpow.pop %v639
        %v641 = vmul.f32 %v634, 1.442695
        %v642 = vpow.pop %v641
        %v643 = vsel %vm314, %v636, 0.0
        %644 = vadd.xlane.f32.xlu0 %v643
        %v645 = vpop.xlane.xlu0 %644
        %v646 = vsel %vm314, %v638, 0.0
        %647 = vadd.xlane.f32.xlu0 %v646
        %v648 = vpop.xlane.xlu0 %647
        %v649 = vsel %vm314, %v640, 0.0
        %650 = vadd.xlane.f32.xlu0 %v649
        %v651 = vpop.xlane.xlu0 %650
        %v652 = vsel %vm314, %v642, 0.0
        %653 = vadd.xlane.f32.xlu0 %v652
        %v654 = vpop.xlane.xlu0 %653
        %v655 = vrcp.pop %v645
        %v656 = vmul.f32 %v636, %v655
        %v657 = vrcp.pop %v648
        %v658 = vmul.f32 %v638, %v657
        %v659 = vrcp.pop %v651
        %v660 = vmul.f32 %v640, %v659
        %v661 = vrcp.pop %v654
        %v662 = vmul.f32 %v642, %v661
        %v664 = vsel %vm314, %v656, 0
        %666 = vmatprep.subr.mxu0 0.0
        %667 = vmatpush1.msra.mxu0 %v309
        %668 = vmatprep.subr.mxu0 0.0
        %669 = vmatpush1.msra.mxu0 0.0
        %670 = vmatprep.subr.mxu0 0.0
        %671 = vmatpush1.msra.mxu0 0.0
        %672 = vmatprep.subr.mxu0 0.0
        %673 = vmatpush1.msra.mxu0 0.0
        %674 = vmatprep.subr.mxu0 0.0
        %675 = vmatpush1.msra.mxu0 0.0
        %676 = vmatprep.subr.mxu0 0.0
        %677 = vmatpush1.msra.mxu0 0.0
        %678 = vmatprep.subr.mxu0 0.0
        %679 = vmatpush1.msra.mxu0 0.0
        %680 = vmatprep.subr.mxu0 0.0
        %681 = vmatpush1.msra.mxu0 0.0
        %682 = vmatprep.subr.mxu0 0.0
        %683 = vmatpush1.msra.mxu0 0.0
        %684 = vmatprep.subr.mxu0 0.0
        %685 = vmatpush1.msra.mxu0 0.0
        %686 = vmatprep.subr.mxu0 0.0
        %687 = vmatpush1.msra.mxu0 0.0
        %688 = vmatprep.subr.mxu0 0.0
        %689 = vmatpush1.msra.mxu0 0.0
        %690 = vmatprep.subr.mxu0 0.0
        %691 = vmatpush1.msra.mxu0 0.0
        %692 = vmatprep.subr.mxu0 0.0
        %693 = vmatpush1.msra.mxu0 0.0
        %694 = vmatprep.subr.mxu0 0.0
        %695 = vmatpush1.msra.mxu0 0.0
        %696 = vmatprep.subr.mxu0 0.0
        %697 = vmatpush1.msra.mxu0 0.0
        %698 = vmatprep.subr.mxu0 0.0
        %699 = vmatpush1.msra.mxu0 0.0
        %700 = vmatprep.subr.mxu0 0.0
        %701 = vmatpush1.msra.mxu0 0.0
        %702 = vmatprep.subr.mxu0 0.0
        %703 = vmatpush1.msra.mxu0 0.0
        %704 = vmatprep.subr.mxu0 0.0
        %705 = vmatpush1.msra.mxu0 0.0
        %706 = vmatprep.subr.mxu0 0.0
        %707 = vmatpush1.msra.mxu0 0.0
        %708 = vmatprep.subr.mxu0 0.0
        %709 = vmatpush1.msra.mxu0 0.0
        %710 = vmatprep.subr.mxu0 0.0
        %711 = vmatpush1.msra.mxu0 0.0
        %712 = vmatprep.subr.mxu0 0.0
        %713 = vmatpush1.msra.mxu0 0.0
        %714 = vmatprep.subr.mxu0 0.0
        %715 = vmatpush1.msra.mxu0 0.0
        %716 = vmatprep.subr.mxu0 0.0
        %717 = vmatpush1.msra.mxu0 0.0
        %718 = vmatprep.subr.mxu0 0.0
        %719 = vmatpush1.msra.mxu0 0.0
        %720 = vmatprep.subr.mxu0 0.0
        %721 = vmatpush1.msra.mxu0 0.0
        %722 = vmatprep.subr.mxu0 0.0
        %723 = vmatpush1.msra.mxu0 0.0
        %724 = vmatprep.subr.mxu0 0.0
        %725 = vmatpush1.msra.mxu0 0.0
        %726 = vmatprep.subr.mxu0 0.0
        %727 = vmatpush1.msra.mxu0 0.0
        %728 = vmatprep.subr.mxu0 0.0
        %729 = vmatpush1.msra.mxu0 0.0
        %730 = vmatprep.mubr.f32.mxu0 0.0
        %731 = vmatmul.mubr.f32.gmra.mrb[0].mxu0 %v664
        %v732 = vpop.f32.mrb[0].mxu0
        %v733 = vadd.f32 0.0, %v732
        %v734 = vpop.f32.mrb[0].mxu0
        %735 = vdwg.mxu0
        %v737 = vsel %vm314, %v658, 0
        %739 = vmatprep.subr.mxu0 0.0
        %740 = vmatpush1.msra.mxu0 %v310
        %741 = vmatprep.subr.mxu0 0.0
        %742 = vmatpush1.msra.mxu0 0.0
        %743 = vmatprep.subr.mxu0 0.0
        %744 = vmatpush1.msra.mxu0 0.0
        %745 = vmatprep.subr.mxu0 0.0
        %746 = vmatpush1.msra.mxu0 0.0
        %747 = vmatprep.subr.mxu0 0.0
        %748 = vmatpush1.msra.mxu0 0.0
        %749 = vmatprep.subr.mxu0 0.0
        %750 = vmatpush1.msra.mxu0 0.0
        %751 = vmatprep.subr.mxu0 0.0
        %752 = vmatpush1.msra.mxu0 0.0
        %753 = vmatprep.subr.mxu0 0.0
        %754 = vmatpush1.msra.mxu0 0.0
        %755 = vmatprep.subr.mxu0 0.0
        %756 = vmatpush1.msra.mxu0 0.0
        %757 = vmatprep.subr.mxu0 0.0
        %758 = vmatpush1.msra.mxu0 0.0
        %759 = vmatprep.subr.mxu0 0.0
        %760 = vmatpush1.msra.mxu0 0.0
        %761 = vmatprep.subr.mxu0 0.0
        %762 = vmatpush1.msra.mxu0 0.0
        %763 = vmatprep.subr.mxu0 0.0
        %764 = vmatpush1.msra.mxu0 0.0
        %765 = vmatprep.subr.mxu0 0.0
        %766 = vmatpush1.msra.mxu0 0.0
        %767 = vmatprep.subr.mxu0 0.0
        %768 = vmatpush1.msra.mxu0 0.0
        %769 = vmatprep.subr.mxu0 0.0
        %770 = vmatpush1.msra.mxu0 0.0
        %771 = vmatprep.subr.mxu0 0.0
        %772 = vmatpush1.msra.mxu0 0.0
        %773 = vmatprep.subr.mxu0 0.0
        %774 = vmatpush1.msra.mxu0 0.0
        %775 = vmatprep.subr.mxu0 0.0
        %776 = vmatpush1.msra.mxu0 0.0
        %777 = vmatprep.subr.mxu0 0.0
        %778 = vmatpush1.msra.mxu0 0.0
        %779 = vmatprep.subr.mxu0 0.0
        %780 = vmatpush1.msra.mxu0 0.0
        %781 = vmatprep.subr.mxu0 0.0
        %782 = vmatpush1.msra.mxu0 0.0
        %783 = vmatprep.subr.mxu0 0.0
        %784 = vmatpush1.msra.mxu0 0.0
        %785 = vmatprep.subr.mxu0 0.0
        %786 = vmatpush1.msra.mxu0 0.0
        %787 = vmatprep.subr.mxu0 0.0
        %788 = vmatpush1.msra.mxu0 0.0
        %789 = vmatprep.subr.mxu0 0.0
        %790 = vmatpush1.msra.mxu0 0.0
        %791 = vmatprep.subr.mxu0 0.0
        %792 = vmatpush1.msra.mxu0 0.0
        %793 = vmatprep.subr.mxu0 0.0
        %794 = vmatpush1.msra.mxu0 0.0
        %795 = vmatprep.subr.mxu0 0.0
        %796 = vmatpush1.msra.mxu0 0.0
        %797 = vmatprep.subr.mxu0 0.0
        %798 = vmatpush1.msra.mxu0 0.0
        %799 = vmatprep.subr.mxu0 0.0
        %800 = vmatpush1.msra.mxu0 0.0
        %801 = vmatprep.subr.mxu0 0.0
        %802 = vmatpush1.msra.mxu0 0.0
        %803 = vmatprep.mubr.f32.mxu0 0.0
        %804 = vmatmul.mubr.f32.gmra.mrb[0].mxu0 %v737
        %v805 = vpop.f32.mrb[0].mxu0
        %v806 = vadd.f32 0.0, %v805
        %v807 = vpop.f32.mrb[0].mxu0
        %808 = vdwg.mxu0
        %v810 = vsel %vm314, %v660, 0
        %812 = vmatprep.subr.mxu0 0.0
        %813 = vmatpush1.msra.mxu0 %v311
        %814 = vmatprep.subr.mxu0 0.0
        %815 = vmatpush1.msra.mxu0 0.0
        %816 = vmatprep.subr.mxu0 0.0
        %817 = vmatpush1.msra.mxu0 0.0
        %818 = vmatprep.subr.mxu0 0.0
        %819 = vmatpush1.msra.mxu0 0.0
        %820 = vmatprep.subr.mxu0 0.0
        %821 = vmatpush1.msra.mxu0 0.0
        %822 = vmatprep.subr.mxu0 0.0
        %823 = vmatpush1.msra.mxu0 0.0
        %824 = vmatprep.subr.mxu0 0.0
        %825 = vmatpush1.msra.mxu0 0.0
        %826 = vmatprep.subr.mxu0 0.0
        %827 = vmatpush1.msra.mxu0 0.0
        %828 = vmatprep.subr.mxu0 0.0
        %829 = vmatpush1.msra.mxu0 0.0
        %830 = vmatprep.subr.mxu0 0.0
        %831 = vmatpush1.msra.mxu0 0.0
        %832 = vmatprep.subr.mxu0 0.0
        %833 = vmatpush1.msra.mxu0 0.0
        %834 = vmatprep.subr.mxu0 0.0
        %835 = vmatpush1.msra.mxu0 0.0
        %836 = vmatprep.subr.mxu0 0.0
        %837 = vmatpush1.msra.mxu0 0.0
        %838 = vmatprep.subr.mxu0 0.0
        %839 = vmatpush1.msra.mxu0 0.0
        %840 = vmatprep.subr.mxu0 0.0
        %841 = vmatpush1.msra.mxu0 0.0
        %842 = vmatprep.subr.mxu0 0.0
        %843 = vmatpush1.msra.mxu0 0.0
        %844 = vmatprep.subr.mxu0 0.0
        %845 = vmatpush1.msra.mxu0 0.0
        %846 = vmatprep.subr.mxu0 0.0
        %847 = vmatpush1.msra.mxu0 0.0
        %848 = vmatprep.subr.mxu0 0.0
        %849 = vmatpush1.msra.mxu0 0.0
        %850 = vmatprep.subr.mxu0 0.0
        %851 = vmatpush1.msra.mxu0 0.0
        %852 = vmatprep.subr.mxu0 0.0
        %853 = vmatpush1.msra.mxu0 0.0
        %854 = vmatprep.subr.mxu0 0.0
        %855 = vmatpush1.msra.mxu0 0.0
        %856 = vmatprep.subr.mxu0 0.0
        %857 = vmatpush1.msra.mxu0 0.0
        %858 = vmatprep.subr.mxu0 0.0
        %859 = vmatpush1.msra.mxu0 0.0
        %860 = vmatprep.subr.mxu0 0.0
        %861 = vmatpush1.msra.mxu0 0.0
        %862 = vmatprep.subr.mxu0 0.0
        %863 = vmatpush1.msra.mxu0 0.0
        %864 = vmatprep.subr.mxu0 0.0
        %865 = vmatpush1.msra.mxu0 0.0
        %866 = vmatprep.subr.mxu0 0.0
        %867 = vmatpush1.msra.mxu0 0.0
        %868 = vmatprep.subr.mxu0 0.0
        %869 = vmatpush1.msra.mxu0 0.0
        %870 = vmatprep.subr.mxu0 0.0
        %871 = vmatpush1.msra.mxu0 0.0
        %872 = vmatprep.subr.mxu0 0.0
        %873 = vmatpush1.msra.mxu0 0.0
        %874 = vmatprep.subr.mxu0 0.0
        %875 = vmatpush1.msra.mxu0 0.0
        %876 = vmatprep.mubr.f32.mxu0 0.0
        %877 = vmatmul.mubr.f32.gmra.mrb[0].mxu0 %v810
        %v878 = vpop.f32.mrb[0].mxu0
        %v879 = vadd.f32 0.0, %v878
        %v880 = vpop.f32.mrb[0].mxu0
        %881 = vdwg.mxu0
        %v883 = vsel %vm314, %v662, 0
        %885 = vmatprep.subr.mxu0 0.0
        %886 = vmatpush1.msra.mxu0 %v312
        %887 = vmatprep.subr.mxu0 0.0
        %888 = vmatpush1.msra.mxu0 0.0
        %889 = vmatprep.subr.mxu0 0.0
        %890 = vmatpush1.msra.mxu0 0.0
        %891 = vmatprep.subr.mxu0 0.0
        %892 = vmatpush1.msra.mxu0 0.0
        %893 = vmatprep.subr.mxu0 0.0
        %894 = vmatpush1.msra.mxu0 0.0
        %895 = vmatprep.subr.mxu0 0.0
        %896 = vmatpush1.msra.mxu0 0.0
        %897 = vmatprep.subr.mxu0 0.0
        %898 = vmatpush1.msra.mxu0 0.0
        %899 = vmatprep.subr.mxu0 0.0
        %900 = vmatpush1.msra.mxu0 0.0
        %901 = vmatprep.subr.mxu0 0.0
        %902 = vmatpush1.msra.mxu0 0.0
        %903 = vmatprep.subr.mxu0 0.0
        %904 = vmatpush1.msra.mxu0 0.0
        %905 = vmatprep.subr.mxu0 0.0
        %906 = vmatpush1.msra.mxu0 0.0
        %907 = vmatprep.subr.mxu0 0.0
        %908 = vmatpush1.msra.mxu0 0.0
        %909 = vmatprep.subr.mxu0 0.0
        %910 = vmatpush1.msra.mxu0 0.0
        %911 = vmatprep.subr.mxu0 0.0
        %912 = vmatpush1.msra.mxu0 0.0
        %913 = vmatprep.subr.mxu0 0.0
        %914 = vmatpush1.msra.mxu0 0.0
        %915 = vmatprep.subr.mxu0 0.0
        %916 = vmatpush1.msra.mxu0 0.0
        %917 = vmatprep.subr.mxu0 0.0
        %918 = vmatpush1.msra.mxu0 0.0
        %919 = vmatprep.subr.mxu0 0.0
        %920 = vmatpush1.msra.mxu0 0.0
        %921 = vmatprep.subr.mxu0 0.0
        %922 = vmatpush1.msra.mxu0 0.0
        %923 = vmatprep.subr.mxu0 0.0
        %924 = vmatpush1.msra.mxu0 0.0
        %925 = vmatprep.subr.mxu0 0.0
        %926 = vmatpush1.msra.mxu0 0.0
        %927 = vmatprep.subr.mxu0 0.0
        %928 = vmatpush1.msra.mxu0 0.0
        %929 = vmatprep.subr.mxu0 0.0
        %930 = vmatpush1.msra.mxu0 0.0
        %931 = vmatprep.subr.mxu0 0.0
        %932 = vmatpush1.msra.mxu0 0.0
        %933 = vmatprep.subr.mxu0 0.0
        %934 = vmatpush1.msra.mxu0 0.0
        %935 = vmatprep.subr.mxu0 0.0
        %936 = vmatpush1.msra.mxu0 0.0
        %937 = vmatprep.subr.mxu0 0.0
        %938 = vmatpush1.msra.mxu0 0.0
        %939 = vmatprep.subr.mxu0 0.0
        %940 = vmatpush1.msra.mxu0 0.0
        %941 = vmatprep.subr.mxu0 0.0
        %942 = vmatpush1.msra.mxu0 0.0
        %943 = vmatprep.subr.mxu0 0.0
        %944 = vmatpush1.msra.mxu0 0.0
        %945 = vmatprep.subr.mxu0 0.0
        %946 = vmatpush1.msra.mxu0 0.0
        %947 = vmatprep.subr.mxu0 0.0
        %948 = vmatpush1.msra.mxu0 0.0
        %949 = vmatprep.mubr.f32.mxu0 0.0
        %950 = vmatmul.mubr.f32.gmra.mrb[0].mxu0 %v883
        %v951 = vpop.f32.mrb[0].mxu0
        %v952 = vadd.f32 0.0, %v951
        %v953 = vpop.f32.mrb[0].mxu0
        %954 = vdwg.mxu0
        %955 = vst.msk [vmem:[%s292] sm:$0xff] %vm314, %v733
        %956 = vst.msk [vmem:[%s292 + $0x8] sm:$0xff] %vm314, %v806
        %957 = vst.msk [vmem:[%s292 + $0x10] sm:$0xff] %vm314, %v879
        %958 = vst.msk [vmem:[%s292 + $0x18] sm:$0xff] %vm314, %v952
        %s959 = sand.u32 %s131, 1
        %s960 = scalar_lea.sflag [#allocation4], %s959
        %s961 = sand.u32 %s131, 1
        %s962 = smul.addr %s961, 32
        %s963 = scalar_lea.vmem [#allocation8], %s962
        // Predicated region
        $region49: #{tpu_custom_call.1} parent=35 // pred_check
          %p964 = pneg %p141
        $region50: #{tpu_custom_call.1} parent=35 // pred_check_branch
          %966 = sbr.rel (%p964) target = $region52
        $region51: #{tpu_custom_call.1} parent=35 // pred_region
          %s967 = smul.u32 4, %s24
          %s969 = ssub.s32 512, 512
          %970 = vsyncadd %s960, %s969
          %s971 = smul.addr %s967, 128
          %s972 = scalar_lea.hbm %s4, %s971
          %s973 = sshll.u32 %s963, 4
          %s974 = int_to_ptr.vmem [resolvable:$true] %s973
          %979 = dma.vmem_to_hbm [thread:$0]  %s974, 512, %s972, %s960, 128, 128, 8
        $region52: #{tpu_custom_call.1} parent=35 // pred_fallthru
          _
      $region36: #{tpu_custom_call.1} parent=5 // pred_fallthru
        _
      %p980 = scmp.le.s32.totalorder 2, %s19
      // Predicated region
      $region53: #{tpu_custom_call.1} parent=5 // pred_check
        %p981 = pneg %p980
      $region54: #{tpu_custom_call.1} parent=5 // pred_check_branch
        %983 = sbr.rel (%p981) target = $region56
      $region55: #{tpu_custom_call.1} parent=5 // pred_region
        %s984 = ssub.s32 %s19, 2
        // Predicated region
        $region57: #{tpu_custom_call.1} parent=55 // pred_check
          %p985 = pneg %p147
        $region58: #{tpu_custom_call.1} parent=55 // pred_check_branch
          %987 = sbr.rel (%p985) target = $region60
        $region59: #{tpu_custom_call.1} parent=55 // pred_region
          %s988 = sand.u32 %s132, 1
          %s989 = scalar_lea.sflag [#allocation4], %s988
          %s990 = sand.u32 %s132, 1
          %s991 = smul.addr %s990, 32
          %s992 = scalar_lea.vmem [#allocation8], %s991
          %993 = dma.done %s989, 512
        $region60: #{tpu_custom_call.1} parent=55 // pred_fallthru
          _
      $region56: #{tpu_custom_call.1} parent=5 // pred_fallthru
        _
    $region6: #{tpu_custom_call.1} parent=1 // loop_footer
      %s23 = sadd.s32 1, %s19
    $region7: #{tpu_custom_call.1} parent=1 // loop_footer_branch
      %18 = sbr.rel target = $region3
    $region8: #{tpu_custom_call.1} parent=1 // loop_exit
      _
    %994 = vsyncpa [#allocation3], 1
    %s995 = scalar_lea.sflag [#allocation3], 1
    %996 = vsyncpa %s995, 1
    %997 = vsyncpa [#allocation6], 1
    %s998 = scalar_lea.sflag [#allocation6], 1
    %999 = vsyncpa %s998, 1
    %1000 = vsyncpa [#allocation4], 1
    %s1001 = scalar_lea.sflag [#allocation4], 1
    %1002 = vsyncpa %s1001, 1

</llo_original>
